<compile_context>
chip_gen: v7x
topology: tpu7x:2x2x1
jax: 0.10.0
libtpu: 0.0.40
codegen_flags: <defaults>
</compile_context>

<pallas_src>
import functools

import jax
import jax.numpy as jnp
from jax.experimental import pallas as pl
from jax.experimental.pallas import tpu as pltpu


def _round_up(a, b):
    return (a + b - 1) // b * b


def _cdiv(a, b):
    return (a + b - 1) // b


# ----------------------------------------------------------------------------
# Kernel
# ----------------------------------------------------------------------------
def highway_kernel(x_ref, wp_ref, bp_ref, wg_ref, bg_ref, o_ref):
    x = x_ref[...]                                     # (tn, E)   f32
    E = x_ref.shape[1]
    mm_dtype = wp_ref.dtype                            # bf16 (default) or f32

    # proj: MXU matmul (weight-dtype inputs, f32 accumulate); bias+relu on VPU.
    x_proj = jnp.dot(x.astype(mm_dtype), wp_ref[...],
                     preferred_element_type=jnp.float32) + bp_ref[...]
    x_proj = jnp.maximum(x_proj, 0.0)                  # (tn, Ep) lane-dense

    # gate: depends on x_proj (matches the PyTorch module) -> second MXU pass.
    g_lin = jnp.dot(x_proj.astype(mm_dtype), wg_ref[...],
                    preferred_element_type=jnp.float32) + bg_ref[...]
    x_gate = jax.nn.sigmoid(g_lin)                     # (tn, E)

    # highway combine: o = x + g * (x_proj - x)   (one fewer VPU multiply).
    # x_proj columns E..Ep are exactly relu(0 + 0) = 0, so the slice is safe.
    o_ref[...] = (x + x_gate * (x_proj[:, :E] - x)).astype(o_ref.dtype)


# ----------------------------------------------------------------------------
# Parameter prep (hoisted out of the per-call path — do once at load time)
# ----------------------------------------------------------------------------
def prepare_highway_params(w_proj, b_proj, w_gate, b_gate,
                           matmul_dtype=jnp.bfloat16):
    """PyTorch Linear weights are (out, in).  Transpose to (in, out) so the
    kernel computes x @ W == x @ W_pt^T, zero-pad only the *intermediate*
    feature dim to Ep = round_up(E, 128) (lane-dense x_proj inside the kernel;
    x and the output stay unpadded at E), and cast weights to the MXU dtype."""
    E = w_proj.shape[0]
    Ep = _round_up(E, 128)
    pad = Ep - E
    wp_t = jnp.pad(w_proj, ((0, pad), (0, 0))).T.astype(matmul_dtype)    # (E, Ep)
    bp2 = jnp.pad(b_proj, (0, pad)).reshape(1, Ep).astype(jnp.float32)   # (1, Ep)
    wg_t = jnp.pad(w_gate, ((0, 0), (0, pad))).T.astype(matmul_dtype)    # (Ep, E)
    bg2 = b_gate.reshape(1, E).astype(jnp.float32)                       # (1, E)
    return wp_t, bp2, wg_t, bg2


# ----------------------------------------------------------------------------
# Tiling / VMEM sizing helpers
# ----------------------------------------------------------------------------
_NUM_TC = 2   # v7x TensorCores per chip; the extra split is cheap on v5e/v6e.


def _choose_row_tile(n_rows, max_tile):
    """Multiple-of-8 row tile, capped at max_tile, with the step count rounded
    up to a multiple of _NUM_TC so v7x's cores stay balanced."""
    if n_rows <= 8:
        return n_rows                                   # single full-array block
    steps = max(_NUM_TC, _cdiv(n_rows, max_tile))
    steps = _round_up(steps, _NUM_TC)
    return min(_round_up(_cdiv(n_rows, steps), 8), _round_up(n_rows, 8))


def _vmem_limit_bytes(tn, E, Ep, mm_bytes):
    f32 = 4
    io = 2 * (tn * E * f32) * 2                 # x-in + out tiles, double-buffered
    wts = 2 * (E * Ep * mm_bytes) * 2           # Wp^T + Wg^T, double-buffered
    bias = 2 * ((Ep + E) * f32) * 2
    tmp = 4 * tn * Ep * f32                     # x_proj / gate / casts / combine temps
    est = io + wts + bias + tmp
    # 4x headroom for compiler scratch; clamp so it always fits v7x's 64 MiB.
    return int(min(max(4 * est, 8 << 20), 56 << 20))


# ----------------------------------------------------------------------------
# Forward
# ----------------------------------------------------------------------------
@functools.partial(jax.jit, static_argnames=("tile_n",))
def highway_apply(x, wp_t, bp2, wg_t, bg2, *, tile_n=1024):
    """x: (N, E) float32 (flatten any leading dims).  Params from
    prepare_highway_params.  Returns (N, E) float32."""
    N, E = x.shape
    Ep = wp_t.shape[1]
    tn = _choose_row_tile(N, tile_n)
    grid = (_cdiv(N, tn),)

    return pl.pallas_call(
        highway_kernel,
        out_shape=jax.ShapeDtypeStruct((N, E), x.dtype),
        grid_spec=pltpu.PrefetchScalarGridSpec(
            num_scalar_prefetch=0,
            grid=grid,
            in_specs=[
                pl.BlockSpec((tn, E), lambda i: (i, 0)),    # x tile   (pipelined)
                pl.BlockSpec((E, Ep), lambda i: (0, 0)),    # Wp^T     (resident)
                pl.BlockSpec((1, Ep), lambda i: (0, 0)),    # bp       (resident)
                pl.BlockSpec((Ep, E), lambda i: (0, 0)),    # Wg^T     (resident)
                pl.BlockSpec((1, E), lambda i: (0, 0)),     # bg       (resident)
            ],
            out_specs=pl.BlockSpec((tn, E), lambda i: (i, 0)),
        ),
        compiler_params=pltpu.CompilerParams(
            dimension_semantics=("parallel",),              # rows -> megacore
            vmem_limit_bytes=_vmem_limit_bytes(
                tn, E, Ep, jnp.dtype(wp_t.dtype).itemsize),
        ),
    )(x, wp_t, bp2, wg_t, bg2)


def highway_forward(x, w_proj, b_proj, w_gate, b_gate, *, tile_n=1024,
                    matmul_dtype=jnp.bfloat16):
    """Convenience one-shot API (re-preps params each call; prefer
    prepare_highway_params + highway_apply when weights are reused)."""
    params = prepare_highway_params(w_proj, b_proj, w_gate, b_gate, matmul_dtype)
    return highway_apply(x, *params, tile_n=tile_n)


# ----------------------------------------------------------------------------
# References & test
# ----------------------------------------------------------------------------
def highway_ref_f32(x, w_proj, b_proj, w_gate, b_gate):
    """Pure-f32 JAX reference mirroring the PyTorch forward exactly."""
    x_proj = jax.nn.relu(x @ w_proj.T + b_proj)
    x_gate = jax.nn.sigmoid(x_proj @ w_gate.T + b_gate)
    return x_gate * x_proj + (1.0 - x_gate) * x


def highway_ref_mixed(x, w_proj, b_proj, w_gate, b_gate,
                      matmul_dtype=jnp.bfloat16):
    """Reference with the kernel's precision recipe (bf16 matmuls, f32 acc)."""
    wp = w_proj.T.astype(matmul_dtype)
    wg = w_gate.T.astype(matmul_dtype)
    x_proj = jnp.maximum(
        jnp.dot(x.astype(matmul_dtype), wp, preferred_element_type=jnp.float32)
        + b_proj, 0.0)
    g = jax.nn.sigmoid(
        jnp.dot(x_proj.astype(matmul_dtype), wg, preferred_element_type=jnp.float32)
        + b_gate)
    return x + g * (x_proj - x)


def _run_case(key, n_rows, word_embed_size):
    k_x, k_wp, k_bp, k_wg, k_bg = jax.random.split(key, 5)
    x = jax.random.normal(k_x, (n_rows, word_embed_size), dtype=jnp.float32)
    w_proj = jax.random.normal(k_wp, (word_embed_size, word_embed_size),
                               dtype=jnp.float32) * 0.1
    b_proj = jax.random.normal(k_bp, (word_embed_size,), dtype=jnp.float32) * 0.1
    w_gate = jax.random.normal(k_wg, (word_embed_size, word_embed_size),
                               dtype=jnp.float32) * 0.1
    b_gate = jax.random.normal(k_bg, (word_embed_size,), dtype=jnp.float32) * 0.1

    # One-time parameter prep (transpose / pad / bf16 cast hoisted out of the
    # per-call path), then the Pallas forward.
    params = prepare_highway_params(w_proj, b_proj, w_gate, b_gate)
    out = jax.block_until_ready(highway_apply(x, *params))
    assert out.shape == (n_rows, word_embed_size)

    # Tight check against a same-precision reference.
    ref_m = highway_ref_mixed(x, w_proj, b_proj, w_gate, b_gate)
    assert jnp.allclose(out, ref_m, atol=1e-4, rtol=1e-4), "mismatch vs mixed ref"
    # Loose sanity check against the pure-f32 PyTorch-equivalent reference
    # (difference is only the bf16 matmul inputs).
    ref_f = highway_ref_f32(x, w_proj, b_proj, w_gate, b_gate)
    assert jnp.allclose(out, ref_f, atol=3e-2, rtol=3e-2), "mismatch vs f32 ref"


if __name__ == "__main__":
    word_embed_size = 32
    batch, seq = 2, 8
    key = jax.random.PRNGKey(0)
    k1, k2 = jax.random.split(key)

    # Primary small case (flatten (batch, seq) -> rows; Linear acts on last dim).
    _run_case(k1, batch * seq, word_embed_size)
    # Secondary case exercising the multi-step grid / ragged-last-tile path.
    _run_case(k2, 600, word_embed_size)

    print("KERNEL_OK")
</pallas_src>

<mosaic_0001>
module attributes {stable_mosaic.version = 11 : i64} {
  func.func @highway_kernel(%arg0: i32, %arg1: memref<8x32xf32, #tpu.memory_space<vmem>>, %arg2: memref<32x128xbf16, #tpu.memory_space<vmem>>, %arg3: memref<1x128xf32, #tpu.memory_space<vmem>>, %arg4: memref<128x32xbf16, #tpu.memory_space<vmem>>, %arg5: memref<1x32xf32, #tpu.memory_space<vmem>>, %arg6: memref<8x32xf32, #tpu.memory_space<vmem>>) attributes {dimension_semantics = [#tpu.dimension_semantics<parallel>], iteration_bounds = array<i64: 2>, scalar_prefetch = 0 : i64, scratch_operands = 0 : i64, tpu.core_type = #tpu.core_type<tc>, window_params = [{transform_indices = @transform_0, window_bounds = array<i64: 8, 32>}, {pipeline_mode = #tpu.pipeline_mode<synchronous>, transform_indices = @transform_1, window_bounds = array<i64: 32, 128>}, {pipeline_mode = #tpu.pipeline_mode<synchronous>, transform_indices = @transform_2, window_bounds = array<i64: 1, 128>}, {pipeline_mode = #tpu.pipeline_mode<synchronous>, transform_indices = @transform_3, window_bounds = array<i64: 128, 32>}, {pipeline_mode = #tpu.pipeline_mode<synchronous>, transform_indices = @transform_4, window_bounds = array<i64: 1, 32>}, {transform_indices = @transform_5, window_bounds = array<i64: 8, 32>}]} {
    %c0 = arith.constant 0 : index
    %c0_0 = arith.constant 0 : index
    %0 = vector.load %arg1[%c0, %c0_0] : memref<8x32xf32, #tpu.memory_space<vmem>>, vector<8x32xf32>
    %1 = arith.truncf %0 : vector<8x32xf32> to vector<8x32xbf16>
    %c0_1 = arith.constant 0 : index
    %c0_2 = arith.constant 0 : index
    %2 = vector.load %arg2[%c0_1, %c0_2] : memref<32x128xbf16, #tpu.memory_space<vmem>>, vector<32x128xbf16>
    %cst = arith.constant dense<0.000000e+00> : vector<8x128xf32>
    %3 = tpu.matmul %1, %2, %cst {dimension_numbers = #tpu.dot_dimension_numbers<[1], [0], [0], [1], [0, 0, 1, 1], [], []>} : vector<8x32xbf16>, vector<32x128xbf16>, vector<8x128xf32> -> vector<8x128xf32>
    %c0_3 = arith.constant 0 : index
    %c0_4 = arith.constant 0 : index
    %4 = vector.load %arg3[%c0_3, %c0_4] : memref<1x128xf32, #tpu.memory_space<vmem>>, vector<1x128xf32>
    %5 = vector.broadcast %4 : vector<1x128xf32> to vector<8x128xf32>
    %6 = arith.addf %3, %5 : vector<8x128xf32>
    %cst_5 = arith.constant 0.000000e+00 : f32
    %7 = vector.broadcast %cst_5 : f32 to vector<8x128xf32>
    %8 = arith.maximumf %6, %7 : vector<8x128xf32>
    %9 = arith.truncf %8 : vector<8x128xf32> to vector<8x128xbf16>
    %c0_6 = arith.constant 0 : index
    %c0_7 = arith.constant 0 : index
    %10 = vector.load %arg4[%c0_6, %c0_7] : memref<128x32xbf16, #tpu.memory_space<vmem>>, vector<128x32xbf16>
    %cst_8 = arith.constant dense<0.000000e+00> : vector<8x32xf32>
    %11 = tpu.matmul %9, %10, %cst_8 {dimension_numbers = #tpu.dot_dimension_numbers<[1], [0], [0], [1], [0, 0, 1, 1], [], []>} : vector<8x128xbf16>, vector<128x32xbf16>, vector<8x32xf32> -> vector<8x32xf32>
    %c0_9 = arith.constant 0 : index
    %c0_10 = arith.constant 0 : index
    %12 = vector.load %arg5[%c0_9, %c0_10] : memref<1x32xf32, #tpu.memory_space<vmem>>, vector<1x32xf32>
    %13 = vector.broadcast %12 : vector<1x32xf32> to vector<8x32xf32>
    %14 = arith.addf %11, %13 : vector<8x32xf32>
    %15 = arith.negf %14 : vector<8x32xf32>
    %16 = math.exp %15 : vector<8x32xf32>
    %cst_11 = arith.constant 1.000000e+00 : f32
    %17 = vector.broadcast %cst_11 : f32 to vector<8x32xf32>
    %18 = arith.addf %17, %16 : vector<8x32xf32>
    %19 = arith.divf %17, %18 : vector<8x32xf32>
    %20 = vector.extract_strided_slice %8 {offsets = [0, 0], sizes = [8, 32], strides = [1, 1]} : vector<8x128xf32> to vector<8x32xf32>
    %21 = arith.subf %20, %0 : vector<8x32xf32>
    %22 = arith.mulf %19, %21 : vector<8x32xf32>
    %23 = arith.addf %0, %22 : vector<8x32xf32>
    %c0_12 = arith.constant 0 : index
    %c0_13 = arith.constant 0 : index
    %24 = vector.load %arg6[%c0_12, %c0_13] : memref<8x32xf32, #tpu.memory_space<vmem>>, vector<8x32xf32>
    tpu.vector_store %arg6[%c0_12, %c0_13], %23 {strides = array<i32>} : memref<8x32xf32, #tpu.memory_space<vmem>>, vector<8x32xf32>,
    return
  }
  func.func @transform_0(%arg0: i32) -> (i32, i32) {
    %c0_i32 = arith.constant 0 : i32
    %c0_i32_0 = arith.constant 0 : i32
    return %arg0, %c0_i32 : i32, i32
  }
  func.func @transform_1(%arg0: i32) -> (i32, i32) {
    %c0_i32 = arith.constant 0 : i32
    %c0_i32_0 = arith.constant 0 : i32
    %c0_i32_1 = arith.constant 0 : i32
    return %c0_i32, %c0_i32_0 : i32, i32
  }
  func.func @transform_2(%arg0: i32) -> (i32, i32) {
    %c0_i32 = arith.constant 0 : i32
    %c0_i32_0 = arith.constant 0 : i32
    %c0_i32_1 = arith.constant 0 : i32
    return %c0_i32, %c0_i32_0 : i32, i32
  }
  func.func @transform_3(%arg0: i32) -> (i32, i32) {
    %c0_i32 = arith.constant 0 : i32
    %c0_i32_0 = arith.constant 0 : i32
    %c0_i32_1 = arith.constant 0 : i32
    return %c0_i32, %c0_i32_0 : i32, i32
  }
  func.func @transform_4(%arg0: i32) -> (i32, i32) {
    %c0_i32 = arith.constant 0 : i32
    %c0_i32_0 = arith.constant 0 : i32
    %c0_i32_1 = arith.constant 0 : i32
    return %c0_i32, %c0_i32_0 : i32, i32
  }
  func.func @transform_5(%arg0: i32) -> (i32, i32) {
    %c0_i32 = arith.constant 0 : i32
    %c0_i32_0 = arith.constant 0 : i32
    return %arg0, %c0_i32 : i32, i32
  }
}

</mosaic_0001>

<llo_original>
// kernel: highway_apply.1
$region0: #{highway_apply.1}
  #allocation0 [shape = 'u32[]', space=smem, size = 0x4, offset = 0x4, fixed_abs, tag = 'smem constant byte address 0x4 - core index']
  #allocation1 [shape = 'u32[144,128]{1,0:T(1,128)}', space=vmem, size = 0x12000, scoped, tag = 'internal scratch']
  %s0 = inlined_call_operand.vmem [shape: f32[16,32], index: 0, kind: input, shape index: {}]
  %s1 = inlined_call_operand.vmem [shape: bf16[32,128], index: 1, kind: input, shape index: {}]
  %s2 = inlined_call_operand.vmem [shape: f32[1,128], index: 2, kind: input, shape index: {}]
  %s3 = inlined_call_operand.vmem [shape: bf16[128,32], index: 3, kind: input, shape index: {}]
  %s4 = inlined_call_operand.vmem [shape: f32[1,32], index: 4, kind: input, shape index: {}]
  %s5 = inlined_call_operand.hbm [shape: f32[16,32], index: 5, kind: output, shape index: {}]
  %s6 = sld [smem:[#allocation0]]
  $region53: #{highway_apply.1} parent=0
    _
  %s8 = ssub.s32 1, %s6
  %s9 = scalar_select 0, %s8, %s6
  $region1: #{highway_apply.1} parent=0
    #allocation2 [shape = 'u8[8192]{0}', space=vmem, size = 0x2000, scoped, tag = 'output window, operand 0']
    #allocation3 [shape = 's32[2]{0}', space=sflag, size = 0x8, scoped, tag = 'scoped memory for highway_apply.1']
    %10 = vsyncpa [#allocation3], 0
    %s11 = scalar_lea.sflag [#allocation3], 1
    %12 = vsyncpa %s11, 0
    loop: start=0, step=1, limit=4
    $region2: #{highway_apply.1} parent=1 // loop_pre_header
      _
    $region3: #{highway_apply.1} parent=1 // loop_header
      %s14 = sphi 0, %s18
      %p15 = scmp.ge.s32.totalorder %s14, 4
      %s24 = sphi 0, %s26
      %s27 = sphi 0, %s24
      %s28 = sphi 0, %s27
      %s44 = sphi 0, %s28
      %s48 = sphi 0, %s48
      %s50 = sphi 0, %s48
      %s51 = sphi 0, %s50
      %s65 = sphi 0, %s51
      %s69 = sphi 0, %s69
      %s71 = sphi 0, %s69
      %s72 = sphi 0, %s71
      %s86 = sphi 0, %s72
      %s90 = sphi 0, %s90
      %s92 = sphi 0, %s90
      %s93 = sphi 0, %s92
      %s107 = sphi 0, %s93
      %s111 = sphi 0, %s111
      %s113 = sphi 0, %s111
      %s114 = sphi 0, %s113
      %s128 = sphi 0, %s114
      %s134 = sphi 0, %s136
      %s137 = sphi 0, %s134
      %s138 = sphi 0, %s137
      %s154 = sphi 0, %s138
    $region4: #{highway_apply.1} parent=1 // loop_header_branch
      %17 = sbr.rel (%p15) target = $region8
    $region5: #{highway_apply.1} parent=1 // loop_body
      %s19 = ssub.s32 %s14, 1
      %s20 = ssub.s32 %s14, 2
      %s21 = sadd.s32 %s14, 1
      %s22 = ssub.s32 %s14, %s21
      %p23 = scmp.eq.s32.totalorder %s22, 0
      %s25 = sadd.s32 %s24, 1
      %s26 = scalar_select %p23, %s24, %s25
      %p29 = pneg %p23
      %p30 = scmp.eq.s32.totalorder %s14, 1
      %p31 = por %p29, %p30
      %p32 = scmp.ne.s32.totalorder %s24, %s27
      %p33 = scmp.eq.s32.totalorder %s14, 0
      %p34 = por %p32, %p33
      %p35 = scmp.ne.s32.totalorder %s24, %s27
      %p36 = scmp.eq.s32.totalorder %s19, 1
      %p37 = por %p35, %p36
      %p38 = scmp.ne.s32.totalorder %s27, %s28
      %p39 = scmp.eq.s32.totalorder %s19, 0
      %p40 = por %p38, %p39
      %p41 = scmp.ne.s32.totalorder %s27, %s28
      %p42 = scmp.eq.s32.totalorder %s20, 1
      %p43 = por %p41, %p42
      %p45 = scmp.ne.s32.totalorder %s28, %s44
      %p46 = scmp.eq.s32.totalorder %s20, 0
      %p47 = por %p45, %p46
      %s49 = sadd.s32 %s48, 1
      %p52 = scmp.eq.s32.totalorder %s14, 1
      %p53 = scmp.ne.s32.totalorder %s48, %s50
      %p54 = scmp.eq.s32.totalorder %s14, 0
      %p55 = por %p53, %p54
      %p56 = scmp.ne.s32.totalorder %s48, %s50
      %p57 = scmp.eq.s32.totalorder %s19, 1
      %p58 = por %p56, %p57
      %p59 = scmp.ne.s32.totalorder %s50, %s51
      %p60 = scmp.eq.s32.totalorder %s19, 0
      %p61 = por %p59, %p60
      %p62 = scmp.ne.s32.totalorder %s50, %s51
      %p63 = scmp.eq.s32.totalorder %s20, 1
      %p64 = por %p62, %p63
      %p66 = scmp.ne.s32.totalorder %s51, %s65
      %p67 = scmp.eq.s32.totalorder %s20, 0
      %p68 = por %p66, %p67
      %s70 = sadd.s32 %s69, 1
      %p73 = scmp.eq.s32.totalorder %s14, 1
      %p74 = scmp.ne.s32.totalorder %s69, %s71
      %p75 = scmp.eq.s32.totalorder %s14, 0
      %p76 = por %p74, %p75
      %p77 = scmp.ne.s32.totalorder %s69, %s71
      %p78 = scmp.eq.s32.totalorder %s19, 1
      %p79 = por %p77, %p78
      %p80 = scmp.ne.s32.totalorder %s71, %s72
      %p81 = scmp.eq.s32.totalorder %s19, 0
      %p82 = por %p80, %p81
      %p83 = scmp.ne.s32.totalorder %s71, %s72
      %p84 = scmp.eq.s32.totalorder %s20, 1
      %p85 = por %p83, %p84
      %p87 = scmp.ne.s32.totalorder %s72, %s86
      %p88 = scmp.eq.s32.totalorder %s20, 0
      %p89 = por %p87, %p88
      %s91 = sadd.s32 %s90, 1
      %p94 = scmp.eq.s32.totalorder %s14, 1
      %p95 = scmp.ne.s32.totalorder %s90, %s92
      %p96 = scmp.eq.s32.totalorder %s14, 0
      %p97 = por %p95, %p96
      %p98 = scmp.ne.s32.totalorder %s90, %s92
      %p99 = scmp.eq.s32.totalorder %s19, 1
      %p100 = por %p98, %p99
      %p101 = scmp.ne.s32.totalorder %s92, %s93
      %p102 = scmp.eq.s32.totalorder %s19, 0
      %p103 = por %p101, %p102
      %p104 = scmp.ne.s32.totalorder %s92, %s93
      %p105 = scmp.eq.s32.totalorder %s20, 1
      %p106 = por %p104, %p105
      %p108 = scmp.ne.s32.totalorder %s93, %s107
      %p109 = scmp.eq.s32.totalorder %s20, 0
      %p110 = por %p108, %p109
      %s112 = sadd.s32 %s111, 1
      %p115 = scmp.eq.s32.totalorder %s14, 1
      %p116 = scmp.ne.s32.totalorder %s111, %s113
      %p117 = scmp.eq.s32.totalorder %s14, 0
      %p118 = por %p116, %p117
      %p119 = scmp.ne.s32.totalorder %s111, %s113
      %p120 = scmp.eq.s32.totalorder %s19, 1
      %p121 = por %p119, %p120
      %p122 = scmp.ne.s32.totalorder %s113, %s114
      %p123 = scmp.eq.s32.totalorder %s19, 0
      %p124 = por %p122, %p123
      %p125 = scmp.ne.s32.totalorder %s113, %s114
      %p126 = scmp.eq.s32.totalorder %s20, 1
      %p127 = por %p125, %p126
      %p129 = scmp.ne.s32.totalorder %s114, %s128
      %p130 = scmp.eq.s32.totalorder %s20, 0
      %p131 = por %p129, %p130
      %s132 = ssub.s32 %s14, %s21
      %p133 = scmp.eq.s32.totalorder %s132, 0
      %s135 = sadd.s32 %s134, 1
      %s136 = scalar_select %p133, %s134, %s135
      %p139 = pneg %p133
      %p140 = scmp.eq.s32.totalorder %s14, 1
      %p141 = por %p139, %p140
      %p142 = scmp.ne.s32.totalorder %s134, %s137
      %p143 = scmp.eq.s32.totalorder %s14, 0
      %p144 = por %p142, %p143
      %p145 = scmp.ne.s32.totalorder %s134, %s137
      %p146 = scmp.eq.s32.totalorder %s19, 1
      %p147 = por %p145, %p146
      %p148 = scmp.ne.s32.totalorder %s137, %s138
      %p149 = scmp.eq.s32.totalorder %s19, 0
      %p150 = por %p148, %p149
      %p151 = scmp.ne.s32.totalorder %s137, %s138
      %p152 = scmp.eq.s32.totalorder %s20, 1
      %p153 = por %p151, %p152
      %p155 = scmp.ne.s32.totalorder %s138, %s154
      %p156 = scmp.eq.s32.totalorder %s20, 0
      %p157 = por %p155, %p156
      %p158 = scmp.le.s32.totalorder 1, %s14
      %p159 = scmp.lt.s32.totalorder %s14, 3
      %p160 = pnand %p158, %p159
      %p161 = pneg %p160
      // Predicated region
      $region9: #{highway_apply.1} parent=5 // pred_check
        _
      $region10: #{highway_apply.1} parent=5 // pred_check_branch
        %163 = sbr.rel (%p160) target = $region12
      $region11: #{highway_apply.1} parent=5 // pred_region
        %s164 = ssub.s32 %s14, 1
        // Predicated region
        $region13: #{highway_apply.1} parent=11 // pred_check
          %p165 = pneg %p61
        $region14: #{highway_apply.1} parent=11 // pred_check_branch
          %167 = sbr.rel (%p165) target = $region16
        $region15: #{highway_apply.1} parent=11 // pred_region
          _
        $region16: #{highway_apply.1} parent=11 // pred_fallthru
          _
        // Predicated region
        $region17: #{highway_apply.1} parent=11 // pred_check
          %p168 = pneg %p82
        $region18: #{highway_apply.1} parent=11 // pred_check_branch
          %170 = sbr.rel (%p168) target = $region20
        $region19: #{highway_apply.1} parent=11 // pred_region
          _
        $region20: #{highway_apply.1} parent=11 // pred_fallthru
          _
        // Predicated region
        $region21: #{highway_apply.1} parent=11 // pred_check
          %p171 = pneg %p103
        $region22: #{highway_apply.1} parent=11 // pred_check_branch
          %173 = sbr.rel (%p171) target = $region24
        $region23: #{highway_apply.1} parent=11 // pred_region
          _
        $region24: #{highway_apply.1} parent=11 // pred_fallthru
          _
        // Predicated region
        $region25: #{highway_apply.1} parent=11 // pred_check
          %p174 = pneg %p124
        $region26: #{highway_apply.1} parent=11 // pred_check_branch
          %176 = sbr.rel (%p174) target = $region28
        $region27: #{highway_apply.1} parent=11 // pred_region
          _
        $region28: #{highway_apply.1} parent=11 // pred_fallthru
          _
      $region12: #{highway_apply.1} parent=5 // pred_fallthru
        _
      %p177 = scmp.lt.s32.totalorder %s14, 2
      // Predicated region
      $region29: #{highway_apply.1} parent=5 // pred_check
        %p178 = pneg %p177
      $region30: #{highway_apply.1} parent=5 // pred_check_branch
        %180 = sbr.rel (%p178) target = $region32
      $region31: #{highway_apply.1} parent=5 // pred_region
        // Predicated region
        $region33: #{highway_apply.1} parent=31 // pred_check
          %p181 = pneg %p34
        $region34: #{highway_apply.1} parent=31 // pred_check_branch
          %183 = sbr.rel (%p181) target = $region36
        $region35: #{highway_apply.1} parent=31 // pred_region
          %p184 = scmp.lt.s32.totalorder %s14, 1
          %s185 = scalar_select %p184, %s14, 1
          %s186 = smul.addr %s185, 8
          %s187 = scalar_lea.vmem %s0, %s186
        $region36: #{highway_apply.1} parent=31 // pred_fallthru
          _
      $region32: #{highway_apply.1} parent=5 // pred_fallthru
        _
      %p188 = scmp.le.s32.totalorder 1, %s14
      %p189 = scmp.lt.s32.totalorder %s14, 3
      %p190 = pnand %p188, %p189
      %p191 = pneg %p190
      // Predicated region
      $region37: #{highway_apply.1} parent=5 // pred_check
        _
      $region38: #{highway_apply.1} parent=5 // pred_check_branch
        %193 = sbr.rel (%p190) target = $region40
      $region39: #{highway_apply.1} parent=5 // pred_region
        %s194 = ssub.s32 %s14, 1
        %p195 = scmp.lt.s32.totalorder %s19, 1
        %s196 = scalar_select %p195, %s19, 1
        %s197 = smul.addr %s196, 8
        %s198 = scalar_lea.vmem %s0, %s197
        %p199 = pneg %p40
        %p200 = pneg %p37
        %p201 = pneg %p61
        %p202 = pneg %p58
        %p203 = pneg %p82
        %p204 = pneg %p79
        %p205 = pneg %p103
        %p206 = pneg %p100
        %p207 = pneg %p124
        %p208 = pneg %p121
        %p209 = pneg %p150
        %p210 = pneg %p147
        %s211 = sand.u32 %s137, 1
        %s212 = scalar_lea.sflag [#allocation3], %s211
        %s213 = sand.u32 %s137, 1
        %s214 = smul.addr %s213, 8
        %s215 = scalar_lea.vmem [#allocation2], %s214
        %p216 = scmp.lt.s32.totalorder %s19, 1
        %s217 = scalar_select %p216, %s19, 1
        %s218 = smul.addr %s217, 8
        %s219 = scalar_lea.vmem %s0, %s218
        %v221 = vld [vmem:[%s219] sm:$0xff]
        %v222 = vpack.c.bf16 %v221, %v221
        %v223 = vld [vmem:[%s1] sm:$0xf]
        %v224 = vld [vmem:[%s1 + $0x4] sm:$0xf]
        %v225 = vld [vmem:[%s1 + $0x8] sm:$0xf]
        %v226 = vld [vmem:[%s1 + $0xc] sm:$0xf]
        %v227 = vld [vmem:[%s2] sm:$0x1]
        %v229 = vlaneseq
        %v230 = vshrl.u32 %v229, 7
        %v231 = vsub.s32 0, %v230
        %v232 = vrot.slane %v227, %v231
        %v238 = vunpack.c.l.b16 %v223
        %v239 = vunpack.c.l.b16 %v224
        %v240 = vunpack.c.l.b16 %v225
        %v241 = vunpack.c.l.b16 %v226
        %v242 = vpack.c.b16 %v239, %v238
        %v243 = vpack.c.b16 %v241, %v240
        %vm246 = vcmask 261120
        %v248 = vsel %vm246, %v222, 0
        %250 = vmatprep.subr.bf16.mxu0 0
        %251 = vmatpush1.bf16.msra.mxu0 %v242
        %252 = vmatprep.subr.bf16.mxu0 0
        %253 = vmatpush1.bf16.msra.mxu0 %v243
        %254 = vmatprep.subr.bf16.mxu0 0
        %255 = vmatpush1.bf16.msra.mxu0 0
        %256 = vmatprep.subr.bf16.mxu0 0
        %257 = vmatpush1.bf16.msra.mxu0 0
        %258 = vmatprep.subr.bf16.mxu0 0
        %259 = vmatpush1.bf16.msra.mxu0 0
        %260 = vmatprep.subr.bf16.mxu0 0
        %261 = vmatpush1.bf16.msra.mxu0 0
        %262 = vmatprep.subr.bf16.mxu0 0
        %263 = vmatpush1.bf16.msra.mxu0 0
        %264 = vmatprep.subr.bf16.mxu0 0
        %265 = vmatpush1.bf16.msra.mxu0 0
        %266 = vmatprep.subr.bf16.mxu0 0
        %267 = vmatpush1.bf16.msra.mxu0 0
        %268 = vmatprep.subr.bf16.mxu0 0
        %269 = vmatpush1.bf16.msra.mxu0 0
        %270 = vmatprep.subr.bf16.mxu0 0
        %271 = vmatpush1.bf16.msra.mxu0 0
        %272 = vmatprep.subr.bf16.mxu0 0
        %273 = vmatpush1.bf16.msra.mxu0 0
        %274 = vmatprep.subr.bf16.mxu0 0
        %275 = vmatpush1.bf16.msra.mxu0 0
        %276 = vmatprep.subr.bf16.mxu0 0
        %277 = vmatpush1.bf16.msra.mxu0 0
        %278 = vmatprep.subr.bf16.mxu0 0
        %279 = vmatpush1.bf16.msra.mxu0 0
        %280 = vmatprep.subr.bf16.mxu0 0
        %281 = vmatpush1.bf16.msra.mxu0 0
        %282 = vmatprep.mubr.bf16.mxu0 0
        %283 = vmatmul.mubr.bf16.gmra.mrb[0].mxu0 %v248
        %v284 = vpop.f32.mrb[0].mxu0
        %v285 = vadd.f32 %v232, %v284
        %v286 = vpop.f32.mrb[0].mxu0
        %v287 = vpop.f32.mrb[0].mxu0
        %v288 = vpop.f32.mrb[0].mxu0
        %289 = vdwg.mxu0
        %v290 = vmax.f32 %v285, 0.0
        %v291 = vpack.c.bf16 %v290, %v290
        %v292 = vld [vmem:[%s3] sm:$0xf]
        %v293 = vld [vmem:[%s3 + $0x4] sm:$0xf]
        %v294 = vld [vmem:[%s3 + $0x8] sm:$0xf]
        %v295 = vld [vmem:[%s3 + $0xc] sm:$0xf]
        %v296 = vld [vmem:[%s3 + $0x10] sm:$0xf]
        %v297 = vld [vmem:[%s3 + $0x14] sm:$0xf]
        %v298 = vld [vmem:[%s3 + $0x18] sm:$0xf]
        %v299 = vld [vmem:[%s3 + $0x1c] sm:$0xf]
        %v300 = vld [vmem:[%s3 + $0x20] sm:$0xf]
        %v301 = vld [vmem:[%s3 + $0x24] sm:$0xf]
        %v302 = vld [vmem:[%s3 + $0x28] sm:$0xf]
        %v303 = vld [vmem:[%s3 + $0x2c] sm:$0xf]
        %v304 = vld [vmem:[%s3 + $0x30] sm:$0xf]
        %v305 = vld [vmem:[%s3 + $0x34] sm:$0xf]
        %v306 = vld [vmem:[%s3 + $0x38] sm:$0xf]
        %v307 = vld [vmem:[%s3 + $0x3c] sm:$0xf]
        %v308 = vld [vmem:[%s4] sm:$0x1]
        %v310 = vlaneseq
        %v311 = vshrl.u32 %v310, 7
        %v312 = vsub.s32 0, %v311
        %v313 = vrot.slane %v308, %v312
        %v331 = vunpack.c.l.b16 %v292
        %v332 = vunpack.c.l.b16 %v293
        %v333 = vunpack.c.l.b16 %v294
        %v334 = vunpack.c.l.b16 %v295
        %v335 = vunpack.c.l.b16 %v296
        %v336 = vunpack.c.l.b16 %v297
        %v337 = vunpack.c.l.b16 %v298
        %v338 = vunpack.c.l.b16 %v299
        %v339 = vunpack.c.l.b16 %v300
        %v340 = vunpack.c.l.b16 %v301
        %v341 = vunpack.c.l.b16 %v302
        %v342 = vunpack.c.l.b16 %v303
        %v343 = vunpack.c.l.b16 %v304
        %v344 = vunpack.c.l.b16 %v305
        %v345 = vunpack.c.l.b16 %v306
        %v346 = vunpack.c.l.b16 %v307
        %v347 = vpack.c.b16 %v332, %v331
        %v348 = vpack.c.b16 %v334, %v333
        %v349 = vpack.c.b16 %v336, %v335
        %v350 = vpack.c.b16 %v338, %v337
        %v351 = vpack.c.b16 %v340, %v339
        %v352 = vpack.c.b16 %v342, %v341
        %v353 = vpack.c.b16 %v344, %v343
        %v354 = vpack.c.b16 %v346, %v345
        %363 = vmatprep.subr.bf16.mxu0 0
        %364 = vmatpush1.bf16.msra.mxu0 %v347
        %365 = vmatprep.subr.bf16.mxu0 0
        %366 = vmatpush1.bf16.msra.mxu0 %v348
        %367 = vmatprep.subr.bf16.mxu0 0
        %368 = vmatpush1.bf16.msra.mxu0 %v349
        %369 = vmatprep.subr.bf16.mxu0 0
        %370 = vmatpush1.bf16.msra.mxu0 %v350
        %371 = vmatprep.subr.bf16.mxu0 0
        %372 = vmatpush1.bf16.msra.mxu0 %v351
        %373 = vmatprep.subr.bf16.mxu0 0
        %374 = vmatpush1.bf16.msra.mxu0 %v352
        %375 = vmatprep.subr.bf16.mxu0 0
        %376 = vmatpush1.bf16.msra.mxu0 %v353
        %377 = vmatprep.subr.bf16.mxu0 0
        %378 = vmatpush1.bf16.msra.mxu0 %v354
        %379 = vmatprep.subr.bf16.mxu0 0
        %380 = vmatpush1.bf16.msra.mxu0 0
        %381 = vmatprep.subr.bf16.mxu0 0
        %382 = vmatpush1.bf16.msra.mxu0 0
        %383 = vmatprep.subr.bf16.mxu0 0
        %384 = vmatpush1.bf16.msra.mxu0 0
        %385 = vmatprep.subr.bf16.mxu0 0
        %386 = vmatpush1.bf16.msra.mxu0 0
        %387 = vmatprep.subr.bf16.mxu0 0
        %388 = vmatpush1.bf16.msra.mxu0 0
        %389 = vmatprep.subr.bf16.mxu0 0
        %390 = vmatpush1.bf16.msra.mxu0 0
        %391 = vmatprep.subr.bf16.mxu0 0
        %392 = vmatpush1.bf16.msra.mxu0 0
        %393 = vmatprep.subr.bf16.mxu0 0
        %394 = vmatpush1.bf16.msra.mxu0 0
        %395 = vmatprep.mubr.bf16.mxu0 0
        %396 = vmatmul.mubr.bf16.gmra.mrb[0].mxu0 %v291
        %v397 = vpop.f32.mrb[0].mxu0
        %v398 = vadd.f32 %v313, %v397
        %v399 = vpop.f32.mrb[0].mxu0
        %v400 = vpop.f32.mrb[0].mxu0
        %v401 = vpop.f32.mrb[0].mxu0
        %402 = vdwg.mxu0
        %v403 = vxor.u32 %v398, 2147483648
        %v404 = vmul.f32 %v403, 1.442695
        %v405 = vpow.pop %v404
        %v406 = vadd.f32 %v405, 1.0
        %v407 = vrcp.pop %v406
        %v408 = vmul.f32 1.0, %v407
        %v409 = vsub.f32 %v290, %v221
        %v410 = vmul.f32 %v408, %v409
        %v411 = vadd.f32 %v221, %v410
        %412 = vst.msk [vmem:[%s215] sm:$0xff] %vm246, %v411
        %s413 = sand.u32 %s137, 1
        %s414 = scalar_lea.sflag [#allocation3], %s413
        %s415 = sand.u32 %s137, 1
        %s416 = smul.addr %s415, 8
        %s417 = scalar_lea.vmem [#allocation2], %s416
        // Predicated region
        $region41: #{highway_apply.1} parent=39 // pred_check
          %p418 = pneg %p147
        $region42: #{highway_apply.1} parent=39 // pred_check_branch
          %420 = sbr.rel (%p418) target = $region44
        $region43: #{highway_apply.1} parent=39 // pred_region
          %s422 = ssub.s32 128, 128
          %423 = vsyncadd %s414, %s422
          %s424 = smul.addr %s19, 128
          %s425 = scalar_lea.hbm %s5, %s424
          %s427 = sshll.u32 %s417, 4
          %s428 = int_to_ptr.vmem [resolvable:$true] %s427
          %430 = dma.vmem_to_hbm [thread:$0]  %s428, 128, %s425, %s414
        $region44: #{highway_apply.1} parent=39 // pred_fallthru
          _
      $region40: #{highway_apply.1} parent=5 // pred_fallthru
        _
      %p431 = scmp.le.s32.totalorder 2, %s14
      // Predicated region
      $region45: #{highway_apply.1} parent=5 // pred_check
        %p432 = pneg %p431
      $region46: #{highway_apply.1} parent=5 // pred_check_branch
        %434 = sbr.rel (%p432) target = $region48
      $region47: #{highway_apply.1} parent=5 // pred_region
        %s435 = ssub.s32 %s14, 2
        // Predicated region
        $region49: #{highway_apply.1} parent=47 // pred_check
          %p436 = pneg %p153
        $region50: #{highway_apply.1} parent=47 // pred_check_branch
          %438 = sbr.rel (%p436) target = $region52
        $region51: #{highway_apply.1} parent=47 // pred_region
          %s439 = sand.u32 %s138, 1
          %s440 = scalar_lea.sflag [#allocation3], %s439
          %s441 = sand.u32 %s138, 1
          %s442 = smul.addr %s441, 8
          %s443 = scalar_lea.vmem [#allocation2], %s442
          %444 = dma.done %s440, 128
        $region52: #{highway_apply.1} parent=47 // pred_fallthru
          _
      $region48: #{highway_apply.1} parent=5 // pred_fallthru
        _
    $region6: #{highway_apply.1} parent=1 // loop_footer
      %s18 = sadd.s32 1, %s14
    $region7: #{highway_apply.1} parent=1 // loop_footer_branch
      %13 = sbr.rel target = $region3
    $region8: #{highway_apply.1} parent=1 // loop_exit
      _
    %445 = vsyncpa [#allocation3], 1
    %s446 = scalar_lea.sflag [#allocation3], 1
    %447 = vsyncpa %s446, 1

</llo_original>
